<compile_context>
chip_gen: v5e
topology: v5e:2x2
jax: 0.10.0
libtpu: 0.0.40
codegen_flags: <defaults>
</compile_context>

<pallas_src>
import functools

import jax
import jax.numpy as jnp
import numpy as np
from jax.experimental import pallas as pl
from jax.experimental.pallas import tpu as pltpu


# ---------------------------------------------------------------------------
# Kernel: x -> (GEMM + bias [+ ReLU]) * num_layers, all blocks resident in VMEM
# ---------------------------------------------------------------------------
def _make_mlp_kernel(num_layers):
    def kernel(*refs):
        x_ref = refs[0]
        o_ref = refs[-1]
        h = x_ref[...]                                     # (BB, F0)
        for l in range(num_layers):
            w = refs[1 + 2 * l][...]                       # (F_l, F_{l+1})
            b = refs[2 + 2 * l][...]                       # (1,   F_{l+1})
            h = jnp.dot(h, w, preferred_element_type=jnp.float32) + b
            if l < num_layers - 1:                         # ReLU on all but last
                h = jnp.maximum(h, 0.0)
        o_ref[...] = h                                     # lane-dense store
    return kernel


# ---------------------------------------------------------------------------
# Lower a 'same'-padded Conv2d to a dense GEMM on NCHW-flattened features.
#   relu(x_flat @ Wd + bd) == relu(conv2d(x, w, b, pad=K//2)).reshape(B, -1)
# (exact math, just a re-indexing of the weights; done once at trace time)
# ---------------------------------------------------------------------------
def _conv_to_gemm(w, b, H, W):
    w = np.asarray(w, np.float32)
    b = np.asarray(b, np.float32)
    C_out, C_in, K, _ = w.shape
    pad = K // 2
    Wd = np.zeros((C_in, H, W, C_out, H, W), np.float32)
    for di in range(K):
        for dj in range(K):
            i_lo, i_hi = max(0, pad - di), min(H, H + pad - di)
            j_lo, j_hi = max(0, pad - dj), min(W, W + pad - dj)
            for i in range(i_lo, i_hi):
                p = i + di - pad
                for j in range(j_lo, j_hi):
                    q = j + dj - pad
                    Wd[:, p, q, :, i, j] = w[:, :, di, dj].T
    Wd = Wd.reshape(C_in * H * W, C_out * H * W)
    bd = np.repeat(b, H * W)[None, :]
    return jnp.asarray(Wd), jnp.asarray(bd)


# ---------------------------------------------------------------------------
# Wrapper
# ---------------------------------------------------------------------------
def deep_net_forward(x, conv_params, fc_params, img_side, *, block_b=8):
    """x: (B, 1, img_side, img_side) f32.  Returns (B, img_side**2, img_side**2)."""
    B = x.shape[0]
    H = W = img_side

    # Build the GEMM layer chain: conv layers (as dense GEMMs) then FC layers.
    layers = []
    for (w, b) in conv_params:
        layers.append(_conv_to_gemm(w, b, H, W))
    for (w, b) in fc_params:
        layers.append((jnp.asarray(w).T, jnp.asarray(b)[None, :]))

    x_flat = x.reshape(B, -1).astype(jnp.float32)          # (B, C_in*H*W), NCHW order
    out_dim = layers[-1][0].shape[1]                        # img_side**4

    bb = min(block_b, B)
    grid = (pl.cdiv(B, bb),)

    in_specs = [pl.BlockSpec((bb, x_flat.shape[1]), lambda i: (i, 0))]
    args = [x_flat]
    for (Wd, bd) in layers:
        in_specs.append(pl.BlockSpec(Wd.shape, lambda i: (0, 0)))   # resident weight
        in_specs.append(pl.BlockSpec(bd.shape, lambda i: (0, 0)))   # resident bias
        args += [Wd, bd]

    y = pl.pallas_call(
        _make_mlp_kernel(len(layers)),
        out_shape=jax.ShapeDtypeStruct((B, out_dim), jnp.float32),
        grid_spec=pltpu.PrefetchScalarGridSpec(
            num_scalar_prefetch=0,
            grid=grid,
            in_specs=in_specs,
            out_specs=pl.BlockSpec((bb, out_dim), lambda i: (i, 0)),
        ),
        compiler_params=pltpu.CompilerParams(
            dimension_semantics=("parallel",)),
    )(*args)

    return y.reshape(B, img_side ** 2, img_side ** 2)


# ---------------------------------------------------------------------------
# Pure-JAX reference mirroring the PyTorch forward exactly.
# ---------------------------------------------------------------------------
def deep_net_forward_ref(x, conv_params, fc_params, img_side):
    B = x.shape[0]
    h = x
    for (w, b) in conv_params:
        pad = w.shape[2] // 2
        h = jax.lax.conv_general_dilated(
            h, w, window_strides=(1, 1),
            padding=[(pad, pad), (pad, pad)],
            dimension_numbers=('NCHW', 'OIHW', 'NCHW'))
        h = h + b[None, :, None, None]
        h = jnp.maximum(h, 0.0)
    h = h.reshape(B, -1)
    for l, (w, b) in enumerate(fc_params):
        h = h @ w.T + b
        if l < len(fc_params) - 1:
            h = jnp.maximum(h, 0.0)
    return h.reshape(B, img_side ** 2, img_side ** 2)


if __name__ == "__main__":
    key = jax.random.PRNGKey(0)

    # Small config consistent with deep_net(img_side=8, num_conv_layers=1,
    # num_fc_layers=1, kernel_side=5, num_conv_features=4, num_fc_features=32)
    img_side = 8
    num_conv_layers = 1
    num_fc_layers = 1
    kernel_side = 5
    num_conv_features = 4
    num_fc_features = 32
    B = 16                              # 2 grid steps at BB=8 (keeps v7x's 2 TCs busy)

    ks = jax.random.split(key, 8)
    x = jax.random.normal(ks[0], (B, 1, img_side, img_side), dtype=jnp.float32)

    # Conv layer parameters (PyTorch-style uniform init).
    c_feats = [1] + (num_conv_layers + 1) * [num_conv_features]
    conv_params = []
    for i in range(num_conv_layers):
        bound = 1.0 / np.sqrt(c_feats[i] * kernel_side ** 2)
        kw, kb = jax.random.split(ks[1 + i])
        w = jax.random.uniform(kw, (c_feats[i + 1], c_feats[i], kernel_side, kernel_side),
                               minval=-bound, maxval=bound, dtype=jnp.float32)
        b = jax.random.uniform(kb, (c_feats[i + 1],),
                               minval=-bound, maxval=bound, dtype=jnp.float32)
        conv_params.append((w, b))

    # FC layer parameters: [img_side^2 * C_last, num_fc_features, ..., img_side^4]
    fc_feats = [img_side ** 2 * c_feats[-1]] + num_fc_layers * [num_fc_features] + [img_side ** 4]
    fc_params = []
    for i in range(num_fc_layers + 1):
        bound = 1.0 / np.sqrt(fc_feats[i])
        kw, kb = jax.random.split(ks[4 + i])
        w = jax.random.uniform(kw, (fc_feats[i + 1], fc_feats[i]),
                               minval=-bound, maxval=bound, dtype=jnp.float32)
        b = jax.random.uniform(kb, (fc_feats[i + 1],),
                               minval=-bound, maxval=bound, dtype=jnp.float32)
        fc_params.append((w, b))

    out = jax.block_until_ready(
        deep_net_forward(x, conv_params, fc_params, img_side, block_b=8))
    ref = jax.block_until_ready(
        deep_net_forward_ref(x, conv_params, fc_params, img_side))

    assert out.shape == (B, img_side ** 2, img_side ** 2)
    np.testing.assert_allclose(np.asarray(out), np.asarray(ref), rtol=2e-4, atol=2e-4)
    print("KERNEL_OK")
</pallas_src>

<mosaic_0001>
module attributes {stable_mosaic.version = 11 : i64} {
  func.func @kernel(%arg0: i32, %arg1: memref<8x64xf32, #tpu.memory_space<vmem>>, %arg2: memref<64x256xf32, #tpu.memory_space<vmem>>, %arg3: memref<1x256xf32, #tpu.memory_space<vmem>>, %arg4: memref<256x32xf32, #tpu.memory_space<vmem>>, %arg5: memref<1x32xf32, #tpu.memory_space<vmem>>, %arg6: memref<32x4096xf32, #tpu.memory_space<vmem>>, %arg7: memref<1x4096xf32, #tpu.memory_space<vmem>>, %arg8: memref<8x4096xf32, #tpu.memory_space<vmem>>) attributes {dimension_semantics = [#tpu.dimension_semantics<parallel>], iteration_bounds = array<i64: 2>, scalar_prefetch = 0 : i64, scratch_operands = 0 : i64, tpu.core_type = #tpu.core_type<tc>, window_params = [{transform_indices = @transform_0, window_bounds = array<i64: 8, 64>}, {pipeline_mode = #tpu.pipeline_mode<synchronous>, transform_indices = @transform_1, window_bounds = array<i64: 64, 256>}, {pipeline_mode = #tpu.pipeline_mode<synchronous>, transform_indices = @transform_2, window_bounds = array<i64: 1, 256>}, {pipeline_mode = #tpu.pipeline_mode<synchronous>, transform_indices = @transform_3, window_bounds = array<i64: 256, 32>}, {pipeline_mode = #tpu.pipeline_mode<synchronous>, transform_indices = @transform_4, window_bounds = array<i64: 1, 32>}, {pipeline_mode = #tpu.pipeline_mode<synchronous>, transform_indices = @transform_5, window_bounds = array<i64: 32, 4096>}, {pipeline_mode = #tpu.pipeline_mode<synchronous>, transform_indices = @transform_6, window_bounds = array<i64: 1, 4096>}, {transform_indices = @transform_7, window_bounds = array<i64: 8, 4096>}]} {
    %c0 = arith.constant 0 : index
    %c0_0 = arith.constant 0 : index
    %0 = vector.load %arg1[%c0, %c0_0] : memref<8x64xf32, #tpu.memory_space<vmem>>, vector<8x64xf32>
    %c0_1 = arith.constant 0 : index
    %c0_2 = arith.constant 0 : index
    %1 = vector.load %arg2[%c0_1, %c0_2] : memref<64x256xf32, #tpu.memory_space<vmem>>, vector<64x256xf32>
    %c0_3 = arith.constant 0 : index
    %c0_4 = arith.constant 0 : index
    %2 = vector.load %arg3[%c0_3, %c0_4] : memref<1x256xf32, #tpu.memory_space<vmem>>, vector<1x256xf32>
    %cst = arith.constant dense<0.000000e+00> : vector<8x256xf32>
    %3 = tpu.matmul %0, %1, %cst {dimension_numbers = #tpu.dot_dimension_numbers<[1], [0], [0], [1], [0, 0, 1, 1], [], []>} : vector<8x64xf32>, vector<64x256xf32>, vector<8x256xf32> -> vector<8x256xf32>
    %4 = vector.broadcast %2 : vector<1x256xf32> to vector<8x256xf32>
    %5 = arith.addf %3, %4 : vector<8x256xf32>
    %cst_5 = arith.constant 0.000000e+00 : f32
    %6 = vector.broadcast %cst_5 : f32 to vector<8x256xf32>
    %7 = arith.maximumf %5, %6 : vector<8x256xf32>
    %c0_6 = arith.constant 0 : index
    %c0_7 = arith.constant 0 : index
    %8 = vector.load %arg4[%c0_6, %c0_7] : memref<256x32xf32, #tpu.memory_space<vmem>>, vector<256x32xf32>
    %c0_8 = arith.constant 0 : index
    %c0_9 = arith.constant 0 : index
    %9 = vector.load %arg5[%c0_8, %c0_9] : memref<1x32xf32, #tpu.memory_space<vmem>>, vector<1x32xf32>
    %cst_10 = arith.constant dense<0.000000e+00> : vector<8x32xf32>
    %10 = tpu.matmul %7, %8, %cst_10 {dimension_numbers = #tpu.dot_dimension_numbers<[1], [0], [0], [1], [0, 0, 1, 1], [], []>} : vector<8x256xf32>, vector<256x32xf32>, vector<8x32xf32> -> vector<8x32xf32>
    %11 = vector.broadcast %9 : vector<1x32xf32> to vector<8x32xf32>
    %12 = arith.addf %10, %11 : vector<8x32xf32>
    %cst_11 = arith.constant 0.000000e+00 : f32
    %13 = vector.broadcast %cst_11 : f32 to vector<8x32xf32>
    %14 = arith.maximumf %12, %13 : vector<8x32xf32>
    %c0_12 = arith.constant 0 : index
    %c0_13 = arith.constant 0 : index
    %15 = vector.load %arg6[%c0_12, %c0_13] : memref<32x4096xf32, #tpu.memory_space<vmem>>, vector<32x4096xf32>
    %c0_14 = arith.constant 0 : index
    %c0_15 = arith.constant 0 : index
    %16 = vector.load %arg7[%c0_14, %c0_15] : memref<1x4096xf32, #tpu.memory_space<vmem>>, vector<1x4096xf32>
    %cst_16 = arith.constant dense<0.000000e+00> : vector<8x4096xf32>
    %17 = tpu.matmul %14, %15, %cst_16 {dimension_numbers = #tpu.dot_dimension_numbers<[1], [0], [0], [1], [0, 0, 1, 1], [], []>} : vector<8x32xf32>, vector<32x4096xf32>, vector<8x4096xf32> -> vector<8x4096xf32>
    %18 = vector.broadcast %16 : vector<1x4096xf32> to vector<8x4096xf32>
    %19 = arith.addf %17, %18 : vector<8x4096xf32>
    %c0_17 = arith.constant 0 : index
    %c0_18 = arith.constant 0 : index
    %20 = vector.load %arg8[%c0_17, %c0_18] : memref<8x4096xf32, #tpu.memory_space<vmem>>, vector<8x4096xf32>
    tpu.vector_store %arg8[%c0_17, %c0_18], %19 {strides = array<i32>} : memref<8x4096xf32, #tpu.memory_space<vmem>>, vector<8x4096xf32>,
    return
  }
  func.func @transform_0(%arg0: i32) -> (i32, i32) {
    %c0_i32 = arith.constant 0 : i32
    %c0_i32_0 = arith.constant 0 : i32
    return %arg0, %c0_i32 : i32, i32
  }
  func.func @transform_1(%arg0: i32) -> (i32, i32) {
    %c0_i32 = arith.constant 0 : i32
    %c0_i32_0 = arith.constant 0 : i32
    %c0_i32_1 = arith.constant 0 : i32
    return %c0_i32, %c0_i32_0 : i32, i32
  }
  func.func @transform_2(%arg0: i32) -> (i32, i32) {
    %c0_i32 = arith.constant 0 : i32
    %c0_i32_0 = arith.constant 0 : i32
    %c0_i32_1 = arith.constant 0 : i32
    return %c0_i32, %c0_i32_0 : i32, i32
  }
  func.func @transform_3(%arg0: i32) -> (i32, i32) {
    %c0_i32 = arith.constant 0 : i32
    %c0_i32_0 = arith.constant 0 : i32
    %c0_i32_1 = arith.constant 0 : i32
    return %c0_i32, %c0_i32_0 : i32, i32
  }
  func.func @transform_4(%arg0: i32) -> (i32, i32) {
    %c0_i32 = arith.constant 0 : i32
    %c0_i32_0 = arith.constant 0 : i32
    %c0_i32_1 = arith.constant 0 : i32
    return %c0_i32, %c0_i32_0 : i32, i32
  }
  func.func @transform_5(%arg0: i32) -> (i32, i32) {
    %c0_i32 = arith.constant 0 : i32
    %c0_i32_0 = arith.constant 0 : i32
    %c0_i32_1 = arith.constant 0 : i32
    return %c0_i32, %c0_i32_0 : i32, i32
  }
  func.func @transform_6(%arg0: i32) -> (i32, i32) {
    %c0_i32 = arith.constant 0 : i32
    %c0_i32_0 = arith.constant 0 : i32
    %c0_i32_1 = arith.constant 0 : i32
    return %c0_i32, %c0_i32_0 : i32, i32
  }
  func.func @transform_7(%arg0: i32) -> (i32, i32) {
    %c0_i32 = arith.constant 0 : i32
    %c0_i32_0 = arith.constant 0 : i32
    return %arg0, %c0_i32 : i32, i32
  }
}

</mosaic_0001>

<llo_original>
// kernel: tpu_custom_call.1
$region0: #{tpu_custom_call.1}
  #allocation0 [shape = 'u32[]', space=smem, size = 0x4, offset = 0x4, fixed_abs, tag = 'smem constant byte address 0x4 - core index']
  #allocation1 [shape = 'u32[72,128]{1,0:T(1,128)}', space=vmem, size = 0x9000, scoped, tag = 'internal scratch']
  %s0 = inlined_call_operand.vmem [shape: f32[16,64], index: 0, kind: input, shape index: {}]
  %s1 = inlined_call_operand.vmem [shape: f32[64,256], index: 1, kind: input, shape index: {}]
  %s2 = inlined_call_operand.vmem [shape: f32[1,256], index: 2, kind: input, shape index: {}]
  %s3 = inlined_call_operand.vmem [shape: f32[256,32], index: 3, kind: input, shape index: {}]
  %s4 = inlined_call_operand.vmem [shape: f32[1,32], index: 4, kind: input, shape index: {}]
  %s5 = inlined_call_operand.hbm [shape: f32[32,4096], index: 5, kind: input, shape index: {}]
  %s6 = inlined_call_operand.vmem [shape: f32[1,4096], index: 6, kind: input, shape index: {}]
  %s7 = inlined_call_operand.hbm [shape: f32[16,4096], index: 7, kind: output, shape index: {}]
  %s8 = sld [smem:[#allocation0]]
  $region65: #{tpu_custom_call.1} parent=0
    _
  %s10 = ssub.s32 1, %s8
  %s11 = scalar_select 0, %s10, %s8
  $region1: #{tpu_custom_call.1} parent=0
    #allocation2 [shape = 'u8[524288]{0}', space=vmem, size = 0x80000, scoped, tag = 'input window, operand 5, single buffered']
    #allocation3 [shape = 's32[2]{0}', space=sflag, size = 0x8, scoped, tag = 'scoped memory for tpu_custom_call.1']
    #allocation4 [shape = 's32[2]{0}', space=sflag, size = 0x8, scoped, tag = 'scoped memory for tpu_custom_call.1']
    #allocation5 [shape = 'u8[262144]{0}', space=vmem, size = 0x40000, scoped, tag = 'output window, operand 0']
    %12 = vsyncpa [#allocation3], 0
    %13 = vsyncpa [#allocation4], 0
    %s14 = scalar_lea.sflag [#allocation4], 1
    %15 = vsyncpa %s14, 0
    loop: start=0, step=1, limit=4
    $region2: #{tpu_custom_call.1} parent=1 // loop_pre_header
      _
    $region3: #{tpu_custom_call.1} parent=1 // loop_header
      %s17 = sphi 0, %s21
      %p18 = scmp.ge.s32.totalorder %s17, 4
      %s27 = sphi 0, %s29
      %s30 = sphi 0, %s27
      %s31 = sphi 0, %s30
      %s47 = sphi 0, %s31
      %s51 = sphi 0, %s51
      %s53 = sphi 0, %s51
      %s54 = sphi 0, %s53
      %s68 = sphi 0, %s54
      %s72 = sphi 0, %s72
      %s74 = sphi 0, %s72
      %s75 = sphi 0, %s74
      %s89 = sphi 0, %s75
      %s93 = sphi 0, %s93
      %s95 = sphi 0, %s93
      %s96 = sphi 0, %s95
      %s110 = sphi 0, %s96
      %s114 = sphi 0, %s114
      %s116 = sphi 0, %s114
      %s117 = sphi 0, %s116
      %s131 = sphi 0, %s117
      %s135 = sphi 0, %s135
      %s137 = sphi 0, %s135
      %s138 = sphi 0, %s137
      %s152 = sphi 0, %s138
      %s156 = sphi 0, %s156
      %s158 = sphi 0, %s156
      %s159 = sphi 0, %s158
      %s173 = sphi 0, %s159
      %s179 = sphi 0, %s181
      %s182 = sphi 0, %s179
      %s183 = sphi 0, %s182
      %s199 = sphi 0, %s183
    $region4: #{tpu_custom_call.1} parent=1 // loop_header_branch
      %20 = sbr.rel (%p18) target = $region8
    $region5: #{tpu_custom_call.1} parent=1 // loop_body
      %s22 = ssub.s32 %s17, 1
      %s23 = ssub.s32 %s17, 2
      %s24 = sadd.s32 %s17, 1
      %s25 = ssub.s32 %s17, %s24
      %p26 = scmp.eq.s32.totalorder %s25, 0
      %s28 = sadd.s32 %s27, 1
      %s29 = scalar_select %p26, %s27, %s28
      %p32 = pneg %p26
      %p33 = scmp.eq.s32.totalorder %s17, 1
      %p34 = por %p32, %p33
      %p35 = scmp.ne.s32.totalorder %s27, %s30
      %p36 = scmp.eq.s32.totalorder %s17, 0
      %p37 = por %p35, %p36
      %p38 = scmp.ne.s32.totalorder %s27, %s30
      %p39 = scmp.eq.s32.totalorder %s22, 1
      %p40 = por %p38, %p39
      %p41 = scmp.ne.s32.totalorder %s30, %s31
      %p42 = scmp.eq.s32.totalorder %s22, 0
      %p43 = por %p41, %p42
      %p44 = scmp.ne.s32.totalorder %s30, %s31
      %p45 = scmp.eq.s32.totalorder %s23, 1
      %p46 = por %p44, %p45
      %p48 = scmp.ne.s32.totalorder %s31, %s47
      %p49 = scmp.eq.s32.totalorder %s23, 0
      %p50 = por %p48, %p49
      %s52 = sadd.s32 %s51, 1
      %p55 = scmp.eq.s32.totalorder %s17, 1
      %p56 = scmp.ne.s32.totalorder %s51, %s53
      %p57 = scmp.eq.s32.totalorder %s17, 0
      %p58 = por %p56, %p57
      %p59 = scmp.ne.s32.totalorder %s51, %s53
      %p60 = scmp.eq.s32.totalorder %s22, 1
      %p61 = por %p59, %p60
      %p62 = scmp.ne.s32.totalorder %s53, %s54
      %p63 = scmp.eq.s32.totalorder %s22, 0
      %p64 = por %p62, %p63
      %p65 = scmp.ne.s32.totalorder %s53, %s54
      %p66 = scmp.eq.s32.totalorder %s23, 1
      %p67 = por %p65, %p66
      %p69 = scmp.ne.s32.totalorder %s54, %s68
      %p70 = scmp.eq.s32.totalorder %s23, 0
      %p71 = por %p69, %p70
      %s73 = sadd.s32 %s72, 1
      %p76 = scmp.eq.s32.totalorder %s17, 1
      %p77 = scmp.ne.s32.totalorder %s72, %s74
      %p78 = scmp.eq.s32.totalorder %s17, 0
      %p79 = por %p77, %p78
      %p80 = scmp.ne.s32.totalorder %s72, %s74
      %p81 = scmp.eq.s32.totalorder %s22, 1
      %p82 = por %p80, %p81
      %p83 = scmp.ne.s32.totalorder %s74, %s75
      %p84 = scmp.eq.s32.totalorder %s22, 0
      %p85 = por %p83, %p84
      %p86 = scmp.ne.s32.totalorder %s74, %s75
      %p87 = scmp.eq.s32.totalorder %s23, 1
      %p88 = por %p86, %p87
      %p90 = scmp.ne.s32.totalorder %s75, %s89
      %p91 = scmp.eq.s32.totalorder %s23, 0
      %p92 = por %p90, %p91
      %s94 = sadd.s32 %s93, 1
      %p97 = scmp.eq.s32.totalorder %s17, 1
      %p98 = scmp.ne.s32.totalorder %s93, %s95
      %p99 = scmp.eq.s32.totalorder %s17, 0
      %p100 = por %p98, %p99
      %p101 = scmp.ne.s32.totalorder %s93, %s95
      %p102 = scmp.eq.s32.totalorder %s22, 1
      %p103 = por %p101, %p102
      %p104 = scmp.ne.s32.totalorder %s95, %s96
      %p105 = scmp.eq.s32.totalorder %s22, 0
      %p106 = por %p104, %p105
      %p107 = scmp.ne.s32.totalorder %s95, %s96
      %p108 = scmp.eq.s32.totalorder %s23, 1
      %p109 = por %p107, %p108
      %p111 = scmp.ne.s32.totalorder %s96, %s110
      %p112 = scmp.eq.s32.totalorder %s23, 0
      %p113 = por %p111, %p112
      %s115 = sadd.s32 %s114, 1
      %p118 = scmp.eq.s32.totalorder %s17, 1
      %p119 = scmp.ne.s32.totalorder %s114, %s116
      %p120 = scmp.eq.s32.totalorder %s17, 0
      %p121 = por %p119, %p120
      %p122 = scmp.ne.s32.totalorder %s114, %s116
      %p123 = scmp.eq.s32.totalorder %s22, 1
      %p124 = por %p122, %p123
      %p125 = scmp.ne.s32.totalorder %s116, %s117
      %p126 = scmp.eq.s32.totalorder %s22, 0
      %p127 = por %p125, %p126
      %p128 = scmp.ne.s32.totalorder %s116, %s117
      %p129 = scmp.eq.s32.totalorder %s23, 1
      %p130 = por %p128, %p129
      %p132 = scmp.ne.s32.totalorder %s117, %s131
      %p133 = scmp.eq.s32.totalorder %s23, 0
      %p134 = por %p132, %p133
      %s136 = sadd.s32 %s135, 1
      %p139 = scmp.eq.s32.totalorder %s17, 1
      %p140 = scmp.ne.s32.totalorder %s135, %s137
      %p141 = scmp.eq.s32.totalorder %s17, 0
      %p142 = por %p140, %p141
      %p143 = scmp.ne.s32.totalorder %s135, %s137
      %p144 = scmp.eq.s32.totalorder %s22, 1
      %p145 = por %p143, %p144
      %p146 = scmp.ne.s32.totalorder %s137, %s138
      %p147 = scmp.eq.s32.totalorder %s22, 0
      %p148 = por %p146, %p147
      %p149 = scmp.ne.s32.totalorder %s137, %s138
      %p150 = scmp.eq.s32.totalorder %s23, 1
      %p151 = por %p149, %p150
      %p153 = scmp.ne.s32.totalorder %s138, %s152
      %p154 = scmp.eq.s32.totalorder %s23, 0
      %p155 = por %p153, %p154
      %s157 = sadd.s32 %s156, 1
      %p160 = scmp.eq.s32.totalorder %s17, 1
      %p161 = scmp.ne.s32.totalorder %s156, %s158
      %p162 = scmp.eq.s32.totalorder %s17, 0
      %p163 = por %p161, %p162
      %p164 = scmp.ne.s32.totalorder %s156, %s158
      %p165 = scmp.eq.s32.totalorder %s22, 1
      %p166 = por %p164, %p165
      %p167 = scmp.ne.s32.totalorder %s158, %s159
      %p168 = scmp.eq.s32.totalorder %s22, 0
      %p169 = por %p167, %p168
      %p170 = scmp.ne.s32.totalorder %s158, %s159
      %p171 = scmp.eq.s32.totalorder %s23, 1
      %p172 = por %p170, %p171
      %p174 = scmp.ne.s32.totalorder %s159, %s173
      %p175 = scmp.eq.s32.totalorder %s23, 0
      %p176 = por %p174, %p175
      %s177 = ssub.s32 %s17, %s24
      %p178 = scmp.eq.s32.totalorder %s177, 0
      %s180 = sadd.s32 %s179, 1
      %s181 = scalar_select %p178, %s179, %s180
      %p184 = pneg %p178
      %p185 = scmp.eq.s32.totalorder %s17, 1
      %p186 = por %p184, %p185
      %p187 = scmp.ne.s32.totalorder %s179, %s182
      %p188 = scmp.eq.s32.totalorder %s17, 0
      %p189 = por %p187, %p188
      %p190 = scmp.ne.s32.totalorder %s179, %s182
      %p191 = scmp.eq.s32.totalorder %s22, 1
      %p192 = por %p190, %p191
      %p193 = scmp.ne.s32.totalorder %s182, %s183
      %p194 = scmp.eq.s32.totalorder %s22, 0
      %p195 = por %p193, %p194
      %p196 = scmp.ne.s32.totalorder %s182, %s183
      %p197 = scmp.eq.s32.totalorder %s23, 1
      %p198 = por %p196, %p197
      %p200 = scmp.ne.s32.totalorder %s183, %s199
      %p201 = scmp.eq.s32.totalorder %s23, 0
      %p202 = por %p200, %p201
      %p203 = scmp.le.s32.totalorder 1, %s17
      %p204 = scmp.lt.s32.totalorder %s17, 3
      %p205 = pnand %p203, %p204
      %p206 = pneg %p205
      // Predicated region
      $region9: #{tpu_custom_call.1} parent=5 // pred_check
        _
      $region10: #{tpu_custom_call.1} parent=5 // pred_check_branch
        %208 = sbr.rel (%p205) target = $region12
      $region11: #{tpu_custom_call.1} parent=5 // pred_region
        %s209 = ssub.s32 %s17, 1
        // Predicated region
        $region13: #{tpu_custom_call.1} parent=11 // pred_check
          %p210 = pneg %p64
        $region14: #{tpu_custom_call.1} parent=11 // pred_check_branch
          %212 = sbr.rel (%p210) target = $region16
        $region15: #{tpu_custom_call.1} parent=11 // pred_region
          _
        $region16: #{tpu_custom_call.1} parent=11 // pred_fallthru
          _
        // Predicated region
        $region17: #{tpu_custom_call.1} parent=11 // pred_check
          %p213 = pneg %p85
        $region18: #{tpu_custom_call.1} parent=11 // pred_check_branch
          %215 = sbr.rel (%p213) target = $region20
        $region19: #{tpu_custom_call.1} parent=11 // pred_region
          _
        $region20: #{tpu_custom_call.1} parent=11 // pred_fallthru
          _
        // Predicated region
        $region21: #{tpu_custom_call.1} parent=11 // pred_check
          %p216 = pneg %p106
        $region22: #{tpu_custom_call.1} parent=11 // pred_check_branch
          %218 = sbr.rel (%p216) target = $region24
        $region23: #{tpu_custom_call.1} parent=11 // pred_region
          _
        $region24: #{tpu_custom_call.1} parent=11 // pred_fallthru
          _
        // Predicated region
        $region25: #{tpu_custom_call.1} parent=11 // pred_check
          %p219 = pneg %p127
        $region26: #{tpu_custom_call.1} parent=11 // pred_check_branch
          %221 = sbr.rel (%p219) target = $region28
        $region27: #{tpu_custom_call.1} parent=11 // pred_region
          _
        $region28: #{tpu_custom_call.1} parent=11 // pred_fallthru
          _
        // Predicated region
        $region29: #{tpu_custom_call.1} parent=11 // pred_check
          %p222 = pneg %p148
        $region30: #{tpu_custom_call.1} parent=11 // pred_check_branch
          %224 = sbr.rel (%p222) target = $region32
        $region31: #{tpu_custom_call.1} parent=11 // pred_region
          %226 = vsyncadd [#allocation3], 0
          %s227 = sshll.u32 %s5, 4
          %s228 = int_to_ptr.hbm [resolvable:$true] %s227
          %s229 = sshll.u32 [#allocation2], 4
          %s230 = int_to_ptr.vmem [resolvable:$true] %s229
          %235 = dma.hbm_to_vmem [thread:$0]  %s228, 16384, %s230, [#allocation3], 4096, 4096, 256
        $region32: #{tpu_custom_call.1} parent=11 // pred_fallthru
          _
        // Predicated region
        $region33: #{tpu_custom_call.1} parent=11 // pred_check
          %p236 = pneg %p169
        $region34: #{tpu_custom_call.1} parent=11 // pred_check_branch
          %238 = sbr.rel (%p236) target = $region36
        $region35: #{tpu_custom_call.1} parent=11 // pred_region
          _
        $region36: #{tpu_custom_call.1} parent=11 // pred_fallthru
          _
      $region12: #{tpu_custom_call.1} parent=5 // pred_fallthru
        _
      %p239 = scmp.lt.s32.totalorder %s17, 2
      // Predicated region
      $region37: #{tpu_custom_call.1} parent=5 // pred_check
        %p240 = pneg %p239
      $region38: #{tpu_custom_call.1} parent=5 // pred_check_branch
        %242 = sbr.rel (%p240) target = $region40
      $region39: #{tpu_custom_call.1} parent=5 // pred_region
        // Predicated region
        $region41: #{tpu_custom_call.1} parent=39 // pred_check
          %p243 = pneg %p37
        $region42: #{tpu_custom_call.1} parent=39 // pred_check_branch
          %245 = sbr.rel (%p243) target = $region44
        $region43: #{tpu_custom_call.1} parent=39 // pred_region
          %p246 = scmp.lt.s32.totalorder %s17, 1
          %s247 = scalar_select %p246, %s17, 1
          %s248 = smul.addr %s247, 8
          %s249 = scalar_lea.vmem %s0, %s248
        $region44: #{tpu_custom_call.1} parent=39 // pred_fallthru
          _
      $region40: #{tpu_custom_call.1} parent=5 // pred_fallthru
        _
      %p250 = scmp.le.s32.totalorder 1, %s17
      %p251 = scmp.lt.s32.totalorder %s17, 3
      %p252 = pnand %p250, %p251
      %p253 = pneg %p252
      // Predicated region
      $region45: #{tpu_custom_call.1} parent=5 // pred_check
        _
      $region46: #{tpu_custom_call.1} parent=5 // pred_check_branch
        %255 = sbr.rel (%p252) target = $region48
      $region47: #{tpu_custom_call.1} parent=5 // pred_region
        %s256 = ssub.s32 %s17, 1
        // Predicated region
        $region49: #{tpu_custom_call.1} parent=47 // pred_check
          %p257 = pneg %p148
        $region50: #{tpu_custom_call.1} parent=47 // pred_check_branch
          %259 = sbr.rel (%p257) target = $region52
        $region51: #{tpu_custom_call.1} parent=47 // pred_region
          %261 = dma.done [#allocation3], 16384
        $region52: #{tpu_custom_call.1} parent=47 // pred_fallthru
          _
        %p262 = scmp.lt.s32.totalorder %s22, 1
        %s263 = scalar_select %p262, %s22, 1
        %s264 = smul.addr %s263, 8
        %s265 = scalar_lea.vmem %s0, %s264
        %p266 = pneg %p43
        %p267 = pneg %p40
        %p268 = pneg %p64
        %p269 = pneg %p61
        %p270 = pneg %p85
        %p271 = pneg %p82
        %p272 = pneg %p106
        %p273 = pneg %p103
        %p274 = pneg %p127
        %p275 = pneg %p124
        %p276 = pneg %p148
        %p277 = pneg %p145
        %p278 = pneg %p169
        %p279 = pneg %p166
        %p280 = pneg %p195
        %p281 = pneg %p192
        %s282 = sand.u32 %s182, 1
        %s283 = scalar_lea.sflag [#allocation4], %s282
        %s284 = sand.u32 %s182, 1
        %s285 = smul.addr %s284, 256
        %s286 = scalar_lea.vmem [#allocation5], %s285
        %p287 = scmp.lt.s32.totalorder %s22, 1
        %s288 = scalar_select %p287, %s22, 1
        %s289 = smul.addr %s288, 8
        %s290 = scalar_lea.vmem %s0, %s289
        %v291 = vld [vmem:[%s290] sm:$0xff]
        %v292 = vld [vmem:[%s1] sm:$0xff]
        %v293 = vld [vmem:[%s1 + $0x8] sm:$0xff]
        %v294 = vld [vmem:[%s1 + $0x10] sm:$0xff]
        %v295 = vld [vmem:[%s1 + $0x18] sm:$0xff]
        %v296 = vld [vmem:[%s1 + $0x20] sm:$0xff]
        %v297 = vld [vmem:[%s1 + $0x28] sm:$0xff]
        %v298 = vld [vmem:[%s1 + $0x30] sm:$0xff]
        %v299 = vld [vmem:[%s1 + $0x38] sm:$0xff]
        %v300 = vld [vmem:[%s1 + $0x40] sm:$0xff]
        %v301 = vld [vmem:[%s1 + $0x48] sm:$0xff]
        %v302 = vld [vmem:[%s1 + $0x50] sm:$0xff]
        %v303 = vld [vmem:[%s1 + $0x58] sm:$0xff]
        %v304 = vld [vmem:[%s1 + $0x60] sm:$0xff]
        %v305 = vld [vmem:[%s1 + $0x68] sm:$0xff]
        %v306 = vld [vmem:[%s1 + $0x70] sm:$0xff]
        %v307 = vld [vmem:[%s1 + $0x78] sm:$0xff]
        %v308 = vld [vmem:[%s2] sm:$0x3]
        %v310 = vperm.slane %v308, 0
        %v311 = vperm.slane %v308, 1
        %vm314 = vcmask 523264
        %v316 = vsel %vm314, %v291, 0
        %318 = vmatpush.msra.mxu0 0.0
        %319 = vmatpush.msra.mxu0 0.0
        %320 = vmatpush.msra.mxu0 0.0
        %321 = vmatpush.msra.mxu0 0.0
        %322 = vmatpush.msra.mxu0 0.0
        %323 = vmatpush.msra.mxu0 0.0
        %324 = vmatpush.msra.mxu0 0.0
        %325 = vmatpush.msra.mxu0 0.0
        %326 = vmatpush.msra.mxu0 %v306
        %327 = vmatpush.msra.mxu0 %v304
        %328 = vmatpush.msra.mxu0 %v302
        %329 = vmatpush.msra.mxu0 %v300
        %330 = vmatpush.msra.mxu0 %v298
        %331 = vmatpush.msra.mxu0 %v296
        %332 = vmatpush.msra.mxu0 %v294
        %333 = vmatpush.msra.mxu0 %v292
        %334 = vmatmul.f32.gmra.mxu0 %v316
        %v335 = vpop.f32.mrf.mxu0
        %v336 = vadd.f32 %v310, %v335
        %337 = vdwg.mxu0
        %338 = vmatpush.msra.mxu0 0.0
        %339 = vmatpush.msra.mxu0 0.0
        %340 = vmatpush.msra.mxu0 0.0
        %341 = vmatpush.msra.mxu0 0.0
        %342 = vmatpush.msra.mxu0 0.0
        %343 = vmatpush.msra.mxu0 0.0
        %344 = vmatpush.msra.mxu0 0.0
        %345 = vmatpush.msra.mxu0 0.0
        %346 = vmatpush.msra.mxu0 %v307
        %347 = vmatpush.msra.mxu0 %v305
        %348 = vmatpush.msra.mxu0 %v303
        %349 = vmatpush.msra.mxu0 %v301
        %350 = vmatpush.msra.mxu0 %v299
        %351 = vmatpush.msra.mxu0 %v297
        %352 = vmatpush.msra.mxu0 %v295
        %353 = vmatpush.msra.mxu0 %v293
        %354 = vmatmul.f32.gmra.mxu0 %v316
        %v355 = vpop.f32.mrf.mxu0
        %v356 = vadd.f32 %v311, %v355
        %357 = vdwg.mxu0
        %v358 = vmax.f32 %v336, 0.0
        %v359 = vmax.f32 %v356, 0.0
        %v360 = vld [vmem:[%s3] sm:$0xff]
        %v361 = vld [vmem:[%s3 + $0x8] sm:$0xff]
        %v362 = vld [vmem:[%s3 + $0x10] sm:$0xff]
        %v363 = vld [vmem:[%s3 + $0x18] sm:$0xff]
        %v364 = vld [vmem:[%s3 + $0x20] sm:$0xff]
        %v365 = vld [vmem:[%s3 + $0x28] sm:$0xff]
        %v366 = vld [vmem:[%s3 + $0x30] sm:$0xff]
        %v367 = vld [vmem:[%s3 + $0x38] sm:$0xff]
        %v368 = vld [vmem:[%s3 + $0x40] sm:$0xff]
        %v369 = vld [vmem:[%s3 + $0x48] sm:$0xff]
        %v370 = vld [vmem:[%s3 + $0x50] sm:$0xff]
        %v371 = vld [vmem:[%s3 + $0x58] sm:$0xff]
        %v372 = vld [vmem:[%s3 + $0x60] sm:$0xff]
        %v373 = vld [vmem:[%s3 + $0x68] sm:$0xff]
        %v374 = vld [vmem:[%s3 + $0x70] sm:$0xff]
        %v375 = vld [vmem:[%s3 + $0x78] sm:$0xff]
        %v376 = vld [vmem:[%s3 + $0x80] sm:$0xff]
        %v377 = vld [vmem:[%s3 + $0x88] sm:$0xff]
        %v378 = vld [vmem:[%s3 + $0x90] sm:$0xff]
        %v379 = vld [vmem:[%s3 + $0x98] sm:$0xff]
        %v380 = vld [vmem:[%s3 + $0xa0] sm:$0xff]
        %v381 = vld [vmem:[%s3 + $0xa8] sm:$0xff]
        %v382 = vld [vmem:[%s3 + $0xb0] sm:$0xff]
        %v383 = vld [vmem:[%s3 + $0xb8] sm:$0xff]
        %v384 = vld [vmem:[%s3 + $0xc0] sm:$0xff]
        %v385 = vld [vmem:[%s3 + $0xc8] sm:$0xff]
        %v386 = vld [vmem:[%s3 + $0xd0] sm:$0xff]
        %v387 = vld [vmem:[%s3 + $0xd8] sm:$0xff]
        %v388 = vld [vmem:[%s3 + $0xe0] sm:$0xff]
        %v389 = vld [vmem:[%s3 + $0xe8] sm:$0xff]
        %v390 = vld [vmem:[%s3 + $0xf0] sm:$0xff]
        %v391 = vld [vmem:[%s3 + $0xf8] sm:$0xff]
        %v392 = vld [vmem:[%s4] sm:$0x1]
        %v394 = vperm.slane %v392, 0
        %396 = vmatpush.msra.mxu0 %v375
        %397 = vmatpush.msra.mxu0 %v374
        %398 = vmatpush.msra.mxu0 %v373
        %399 = vmatpush.msra.mxu0 %v372
        %400 = vmatpush.msra.mxu0 %v371
        %401 = vmatpush.msra.mxu0 %v370
        %402 = vmatpush.msra.mxu0 %v369
        %403 = vmatpush.msra.mxu0 %v368
        %404 = vmatpush.msra.mxu0 %v367
        %405 = vmatpush.msra.mxu0 %v366
        %406 = vmatpush.msra.mxu0 %v365
        %407 = vmatpush.msra.mxu0 %v364
        %408 = vmatpush.msra.mxu0 %v363
        %409 = vmatpush.msra.mxu0 %v362
        %410 = vmatpush.msra.mxu0 %v361
        %411 = vmatpush.msra.mxu0 %v360
        %412 = vmatmul.f32.gmra.mxu0 %v358
        %v413 = vpop.f32.mrf.mxu0
        %v414 = vadd.f32 %v394, %v413
        %415 = vdwg.mxu0
        %416 = vmatpush.msra.mxu0 %v391
        %417 = vmatpush.msra.mxu0 %v390
        %418 = vmatpush.msra.mxu0 %v389
        %419 = vmatpush.msra.mxu0 %v388
        %420 = vmatpush.msra.mxu0 %v387
        %421 = vmatpush.msra.mxu0 %v386
        %422 = vmatpush.msra.mxu0 %v385
        %423 = vmatpush.msra.mxu0 %v384
        %424 = vmatpush.msra.mxu0 %v383
        %425 = vmatpush.msra.mxu0 %v382
        %426 = vmatpush.msra.mxu0 %v381
        %427 = vmatpush.msra.mxu0 %v380
        %428 = vmatpush.msra.mxu0 %v379
        %429 = vmatpush.msra.mxu0 %v378
        %430 = vmatpush.msra.mxu0 %v377
        %431 = vmatpush.msra.mxu0 %v376
        %432 = vmatmul.f32.gmra.mxu0 %v359
        %v433 = vpop.f32.mrf.mxu0
        %v434 = vadd.f32 %v414, %v433
        %435 = vdwg.mxu0
        %v436 = vmax.f32 %v434, 0.0
        %v437 = vld [vmem:[#allocation2] sm:$0xff]
        %v438 = vld [vmem:[#allocation2 + $0x8] sm:$0xff]
        %v439 = vld [vmem:[#allocation2 + $0x10] sm:$0xff]
        %v440 = vld [vmem:[#allocation2 + $0x18] sm:$0xff]
        %v441 = vld [vmem:[#allocation2 + $0x20] sm:$0xff]
        %v442 = vld [vmem:[#allocation2 + $0x28] sm:$0xff]
        %v443 = vld [vmem:[#allocation2 + $0x30] sm:$0xff]
        %v444 = vld [vmem:[#allocation2 + $0x38] sm:$0xff]
        %v445 = vld [vmem:[#allocation2 + $0x40] sm:$0xff]
        %v446 = vld [vmem:[#allocation2 + $0x48] sm:$0xff]
        %v447 = vld [vmem:[#allocation2 + $0x50] sm:$0xff]
        %v448 = vld [vmem:[#allocation2 + $0x58] sm:$0xff]
        %v449 = vld [vmem:[#allocation2 + $0x60] sm:$0xff]
        %v450 = vld [vmem:[#allocation2 + $0x68] sm:$0xff]
        %v451 = vld [vmem:[#allocation2 + $0x70] sm:$0xff]
        %v452 = vld [vmem:[#allocation2 + $0x78] sm:$0xff]
        %v453 = vld [vmem:[#allocation2 + $0x80] sm:$0xff]
        %v454 = vld [vmem:[#allocation2 + $0x88] sm:$0xff]
        %v455 = vld [vmem:[#allocation2 + $0x90] sm:$0xff]
        %v456 = vld [vmem:[#allocation2 + $0x98] sm:$0xff]
        %v457 = vld [vmem:[#allocation2 + $0xa0] sm:$0xff]
        %v458 = vld [vmem:[#allocation2 + $0xa8] sm:$0xff]
        %v459 = vld [vmem:[#allocation2 + $0xb0] sm:$0xff]
        %v460 = vld [vmem:[#allocation2 + $0xb8] sm:$0xff]
        %v461 = vld [vmem:[#allocation2 + $0xc0] sm:$0xff]
        %v462 = vld [vmem:[#allocation2 + $0xc8] sm:$0xff]
        %v463 = vld [vmem:[#allocation2 + $0xd0] sm:$0xff]
        %v464 = vld [vmem:[#allocation2 + $0xd8] sm:$0xff]
        %v465 = vld [vmem:[#allocation2 + $0xe0] sm:$0xff]
        %v466 = vld [vmem:[#allocation2 + $0xe8] sm:$0xff]
        %v467 = vld [vmem:[#allocation2 + $0xf0] sm:$0xff]
        %v468 = vld [vmem:[#allocation2 + $0xf8] sm:$0xff]
        %v469 = vld [vmem:[#allocation2 + $0x100] sm:$0xff]
        %v470 = vld [vmem:[#allocation2 + $0x108] sm:$0xff]
        %v471 = vld [vmem:[#allocation2 + $0x110] sm:$0xff]
        %v472 = vld [vmem:[#allocation2 + $0x118] sm:$0xff]
        %v473 = vld [vmem:[#allocation2 + $0x120] sm:$0xff]
        %v474 = vld [vmem:[#allocation2 + $0x128] sm:$0xff]
        %v475 = vld [vmem:[#allocation2 + $0x130] sm:$0xff]
        %v476 = vld [vmem:[#allocation2 + $0x138] sm:$0xff]
        %v477 = vld [vmem:[#allocation2 + $0x140] sm:$0xff]
        %v478 = vld [vmem:[#allocation2 + $0x148] sm:$0xff]
        %v479 = vld [vmem:[#allocation2 + $0x150] sm:$0xff]
        %v480 = vld [vmem:[#allocation2 + $0x158] sm:$0xff]
        %v481 = vld [vmem:[#allocation2 + $0x160] sm:$0xff]
        %v482 = vld [vmem:[#allocation2 + $0x168] sm:$0xff]
        %v483 = vld [vmem:[#allocation2 + $0x170] sm:$0xff]
        %v484 = vld [vmem:[#allocation2 + $0x178] sm:$0xff]
        %v485 = vld [vmem:[#allocation2 + $0x180] sm:$0xff]
        %v486 = vld [vmem:[#allocation2 + $0x188] sm:$0xff]
        %v487 = vld [vmem:[#allocation2 + $0x190] sm:$0xff]
        %v488 = vld [vmem:[#allocation2 + $0x198] sm:$0xff]
        %v489 = vld [vmem:[#allocation2 + $0x1a0] sm:$0xff]
        %v490 = vld [vmem:[#allocation2 + $0x1a8] sm:$0xff]
        %v491 = vld [vmem:[#allocation2 + $0x1b0] sm:$0xff]
        %v492 = vld [vmem:[#allocation2 + $0x1b8] sm:$0xff]
        %v493 = vld [vmem:[#allocation2 + $0x1c0] sm:$0xff]
        %v494 = vld [vmem:[#allocation2 + $0x1c8] sm:$0xff]
        %v495 = vld [vmem:[#allocation2 + $0x1d0] sm:$0xff]
        %v496 = vld [vmem:[#allocation2 + $0x1d8] sm:$0xff]
        %v497 = vld [vmem:[#allocation2 + $0x1e0] sm:$0xff]
        %v498 = vld [vmem:[#allocation2 + $0x1e8] sm:$0xff]
        %v499 = vld [vmem:[#allocation2 + $0x1f0] sm:$0xff]
        %v500 = vld [vmem:[#allocation2 + $0x1f8] sm:$0xff]
        %v501 = vld [vmem:[#allocation2 + $0x200] sm:$0xff]
        %v502 = vld [vmem:[#allocation2 + $0x208] sm:$0xff]
        %v503 = vld [vmem:[#allocation2 + $0x210] sm:$0xff]
        %v504 = vld [vmem:[#allocation2 + $0x218] sm:$0xff]
        %v505 = vld [vmem:[#allocation2 + $0x220] sm:$0xff]
        %v506 = vld [vmem:[#allocation2 + $0x228] sm:$0xff]
        %v507 = vld [vmem:[#allocation2 + $0x230] sm:$0xff]
        %v508 = vld [vmem:[#allocation2 + $0x238] sm:$0xff]
        %v509 = vld [vmem:[#allocation2 + $0x240] sm:$0xff]
        %v510 = vld [vmem:[#allocation2 + $0x248] sm:$0xff]
        %v511 = vld [vmem:[#allocation2 + $0x250] sm:$0xff]
        %v512 = vld [vmem:[#allocation2 + $0x258] sm:$0xff]
        %v513 = vld [vmem:[#allocation2 + $0x260] sm:$0xff]
        %v514 = vld [vmem:[#allocation2 + $0x268] sm:$0xff]
        %v515 = vld [vmem:[#allocation2 + $0x270] sm:$0xff]
        %v516 = vld [vmem:[#allocation2 + $0x278] sm:$0xff]
        %v517 = vld [vmem:[#allocation2 + $0x280] sm:$0xff]
        %v518 = vld [vmem:[#allocation2 + $0x288] sm:$0xff]
        %v519 = vld [vmem:[#allocation2 + $0x290] sm:$0xff]
        %v520 = vld [vmem:[#allocation2 + $0x298] sm:$0xff]
        %v521 = vld [vmem:[#allocation2 + $0x2a0] sm:$0xff]
        %v522 = vld [vmem:[#allocation2 + $0x2a8] sm:$0xff]
        %v523 = vld [vmem:[#allocation2 + $0x2b0] sm:$0xff]
        %v524 = vld [vmem:[#allocation2 + $0x2b8] sm:$0xff]
        %v525 = vld [vmem:[#allocation2 + $0x2c0] sm:$0xff]
        %v526 = vld [vmem:[#allocation2 + $0x2c8] sm:$0xff]
        %v527 = vld [vmem:[#allocation2 + $0x2d0] sm:$0xff]
        %v528 = vld [vmem:[#allocation2 + $0x2d8] sm:$0xff]
        %v529 = vld [vmem:[#allocation2 + $0x2e0] sm:$0xff]
        %v530 = vld [vmem:[#allocation2 + $0x2e8] sm:$0xff]
        %v531 = vld [vmem:[#allocation2 + $0x2f0] sm:$0xff]
        %v532 = vld [vmem:[#allocation2 + $0x2f8] sm:$0xff]
        %v533 = vld [vmem:[#allocation2 + $0x300] sm:$0xff]
        %v534 = vld [vmem:[#allocation2 + $0x308] sm:$0xff]
        %v535 = vld [vmem:[#allocation2 + $0x310] sm:$0xff]
        %v536 = vld [vmem:[#allocation2 + $0x318] sm:$0xff]
        %v537 = vld [vmem:[#allocation2 + $0x320] sm:$0xff]
        %v538 = vld [vmem:[#allocation2 + $0x328] sm:$0xff]
        %v539 = vld [vmem:[#allocation2 + $0x330] sm:$0xff]
        %v540 = vld [vmem:[#allocation2 + $0x338] sm:$0xff]
        %v541 = vld [vmem:[#allocation2 + $0x340] sm:$0xff]
        %v542 = vld [vmem:[#allocation2 + $0x348] sm:$0xff]
        %v543 = vld [vmem:[#allocation2 + $0x350] sm:$0xff]
        %v544 = vld [vmem:[#allocation2 + $0x358] sm:$0xff]
        %v545 = vld [vmem:[#allocation2 + $0x360] sm:$0xff]
        %v546 = vld [vmem:[#allocation2 + $0x368] sm:$0xff]
        %v547 = vld [vmem:[#allocation2 + $0x370] sm:$0xff]
        %v548 = vld [vmem:[#allocation2 + $0x378] sm:$0xff]
        %v549 = vld [vmem:[#allocation2 + $0x380] sm:$0xff]
        %v550 = vld [vmem:[#allocation2 + $0x388] sm:$0xff]
        %v551 = vld [vmem:[#allocation2 + $0x390] sm:$0xff]
        %v552 = vld [vmem:[#allocation2 + $0x398] sm:$0xff]
        %v553 = vld [vmem:[#allocation2 + $0x3a0] sm:$0xff]
        %v554 = vld [vmem:[#allocation2 + $0x3a8] sm:$0xff]
        %v555 = vld [vmem:[#allocation2 + $0x3b0] sm:$0xff]
        %v556 = vld [vmem:[#allocation2 + $0x3b8] sm:$0xff]
        %v557 = vld [vmem:[#allocation2 + $0x3c0] sm:$0xff]
        %v558 = vld [vmem:[#allocation2 + $0x3c8] sm:$0xff]
        %v559 = vld [vmem:[#allocation2 + $0x3d0] sm:$0xff]
        %v560 = vld [vmem:[#allocation2 + $0x3d8] sm:$0xff]
        %v561 = vld [vmem:[#allocation2 + $0x3e0] sm:$0xff]
        %v562 = vld [vmem:[#allocation2 + $0x3e8] sm:$0xff]
        %v563 = vld [vmem:[#allocation2 + $0x3f0] sm:$0xff]
        %v564 = vld [vmem:[#allocation2 + $0x3f8] sm:$0xff]
        %v565 = vld [vmem:[%s6] sm:$0xff]
        %v566 = vld [vmem:[%s6 + $0x8] sm:$0xff]
        %v567 = vld [vmem:[%s6 + $0x10] sm:$0xff]
        %v568 = vld [vmem:[%s6 + $0x18] sm:$0xff]
        %v573 = vperm.slane %v565, 0
        %v574 = vperm.slane %v565, 1
        %v575 = vperm.slane %v565, 2
        %v576 = vperm.slane %v565, 3
        %v577 = vperm.slane %v565, 4
        %v578 = vperm.slane %v565, 5
        %v579 = vperm.slane %v565, 6
        %v580 = vperm.slane %v565, 7
        %v581 = vperm.slane %v566, 0
        %v582 = vperm.slane %v566, 1
        %v583 = vperm.slane %v566, 2
        %v584 = vperm.slane %v566, 3
        %v585 = vperm.slane %v566, 4
        %v586 = vperm.slane %v566, 5
        %v587 = vperm.slane %v566, 6
        %v588 = vperm.slane %v566, 7
        %v589 = vperm.slane %v567, 0
        %v590 = vperm.slane %v567, 1
        %v591 = vperm.slane %v567, 2
        %v592 = vperm.slane %v567, 3
        %v593 = vperm.slane %v567, 4
        %v594 = vperm.slane %v567, 5
        %v595 = vperm.slane %v567, 6
        %v596 = vperm.slane %v567, 7
        %v597 = vperm.slane %v568, 0
        %v598 = vperm.slane %v568, 1
        %v599 = vperm.slane %v568, 2
        %v600 = vperm.slane %v568, 3
        %v601 = vperm.slane %v568, 4
        %v602 = vperm.slane %v568, 5
        %v603 = vperm.slane %v568, 6
        %v604 = vperm.slane %v568, 7
        %vm637 = vcmask 261120
        %v639 = vsel %vm637, %v436, 0
        %641 = vmatpush.msra.mxu0 0.0
        %642 = vmatpush.msra.mxu0 0.0
        %643 = vmatpush.msra.mxu0 0.0
        %644 = vmatpush.msra.mxu0 0.0
        %645 = vmatpush.msra.mxu0 0.0
        %646 = vmatpush.msra.mxu0 0.0
        %647 = vmatpush.msra.mxu0 0.0
        %648 = vmatpush.msra.mxu0 0.0
        %649 = vmatpush.msra.mxu0 0.0
        %650 = vmatpush.msra.mxu0 0.0
        %651 = vmatpush.msra.mxu0 0.0
        %652 = vmatpush.msra.mxu0 0.0
        %653 = vmatpush.msra.mxu0 %v533
        %654 = vmatpush.msra.mxu0 %v501
        %655 = vmatpush.msra.mxu0 %v469
        %656 = vmatpush.msra.mxu0 %v437
        %657 = vmatmul.f32.gmra.mxu0 %v639
        %v658 = vpop.f32.mrf.mxu0
        %v659 = vadd.f32 %v573, %v658
        %660 = vdwg.mxu0
        %661 = vmatpush.msra.mxu0 0.0
        %662 = vmatpush.msra.mxu0 0.0
        %663 = vmatpush.msra.mxu0 0.0
        %664 = vmatpush.msra.mxu0 0.0
        %665 = vmatpush.msra.mxu0 0.0
        %666 = vmatpush.msra.mxu0 0.0
        %667 = vmatpush.msra.mxu0 0.0
        %668 = vmatpush.msra.mxu0 0.0
        %669 = vmatpush.msra.mxu0 0.0
        %670 = vmatpush.msra.mxu0 0.0
        %671 = vmatpush.msra.mxu0 0.0
        %672 = vmatpush.msra.mxu0 0.0
        %673 = vmatpush.msra.mxu0 %v534
        %674 = vmatpush.msra.mxu0 %v502
        %675 = vmatpush.msra.mxu0 %v470
        %676 = vmatpush.msra.mxu0 %v438
        %677 = vmatmul.f32.gmra.mxu0 %v639
        %v678 = vpop.f32.mrf.mxu0
        %v679 = vadd.f32 %v574, %v678
        %680 = vdwg.mxu0
        %681 = vmatpush.msra.mxu0 0.0
        %682 = vmatpush.msra.mxu0 0.0
        %683 = vmatpush.msra.mxu0 0.0
        %684 = vmatpush.msra.mxu0 0.0
        %685 = vmatpush.msra.mxu0 0.0
        %686 = vmatpush.msra.mxu0 0.0
        %687 = vmatpush.msra.mxu0 0.0
        %688 = vmatpush.msra.mxu0 0.0
        %689 = vmatpush.msra.mxu0 0.0
        %690 = vmatpush.msra.mxu0 0.0
        %691 = vmatpush.msra.mxu0 0.0
        %692 = vmatpush.msra.mxu0 0.0
        %693 = vmatpush.msra.mxu0 %v535
        %694 = vmatpush.msra.mxu0 %v503
        %695 = vmatpush.msra.mxu0 %v471
        %696 = vmatpush.msra.mxu0 %v439
        %697 = vmatmul.f32.gmra.mxu0 %v639
        %v698 = vpop.f32.mrf.mxu0
        %v699 = vadd.f32 %v575, %v698
        %700 = vdwg.mxu0
        %701 = vmatpush.msra.mxu0 0.0
        %702 = vmatpush.msra.mxu0 0.0
        %703 = vmatpush.msra.mxu0 0.0
        %704 = vmatpush.msra.mxu0 0.0
        %705 = vmatpush.msra.mxu0 0.0
        %706 = vmatpush.msra.mxu0 0.0
        %707 = vmatpush.msra.mxu0 0.0
        %708 = vmatpush.msra.mxu0 0.0
        %709 = vmatpush.msra.mxu0 0.0
        %710 = vmatpush.msra.mxu0 0.0
        %711 = vmatpush.msra.mxu0 0.0
        %712 = vmatpush.msra.mxu0 0.0
        %713 = vmatpush.msra.mxu0 %v536
        %714 = vmatpush.msra.mxu0 %v504
        %715 = vmatpush.msra.mxu0 %v472
        %716 = vmatpush.msra.mxu0 %v440
        %717 = vmatmul.f32.gmra.mxu0 %v639
        %v718 = vpop.f32.mrf.mxu0
        %v719 = vadd.f32 %v576, %v718
        %720 = vdwg.mxu0
        %721 = vmatpush.msra.mxu0 0.0
        %722 = vmatpush.msra.mxu0 0.0
        %723 = vmatpush.msra.mxu0 0.0
        %724 = vmatpush.msra.mxu0 0.0
        %725 = vmatpush.msra.mxu0 0.0
        %726 = vmatpush.msra.mxu0 0.0
        %727 = vmatpush.msra.mxu0 0.0
        %728 = vmatpush.msra.mxu0 0.0
        %729 = vmatpush.msra.mxu0 0.0
        %730 = vmatpush.msra.mxu0 0.0
        %731 = vmatpush.msra.mxu0 0.0
        %732 = vmatpush.msra.mxu0 0.0
        %733 = vmatpush.msra.mxu0 %v537
        %734 = vmatpush.msra.mxu0 %v505
        %735 = vmatpush.msra.mxu0 %v473
        %736 = vmatpush.msra.mxu0 %v441
        %737 = vmatmul.f32.gmra.mxu0 %v639
        %v738 = vpop.f32.mrf.mxu0
        %v739 = vadd.f32 %v577, %v738
        %740 = vdwg.mxu0
        %741 = vmatpush.msra.mxu0 0.0
        %742 = vmatpush.msra.mxu0 0.0
        %743 = vmatpush.msra.mxu0 0.0
        %744 = vmatpush.msra.mxu0 0.0
        %745 = vmatpush.msra.mxu0 0.0
        %746 = vmatpush.msra.mxu0 0.0
        %747 = vmatpush.msra.mxu0 0.0
        %748 = vmatpush.msra.mxu0 0.0
        %749 = vmatpush.msra.mxu0 0.0
        %750 = vmatpush.msra.mxu0 0.0
        %751 = vmatpush.msra.mxu0 0.0
        %752 = vmatpush.msra.mxu0 0.0
        %753 = vmatpush.msra.mxu0 %v538
        %754 = vmatpush.msra.mxu0 %v506
        %755 = vmatpush.msra.mxu0 %v474
        %756 = vmatpush.msra.mxu0 %v442
        %757 = vmatmul.f32.gmra.mxu0 %v639
        %v758 = vpop.f32.mrf.mxu0
        %v759 = vadd.f32 %v578, %v758
        %760 = vdwg.mxu0
        %761 = vmatpush.msra.mxu0 0.0
        %762 = vmatpush.msra.mxu0 0.0
        %763 = vmatpush.msra.mxu0 0.0
        %764 = vmatpush.msra.mxu0 0.0
        %765 = vmatpush.msra.mxu0 0.0
        %766 = vmatpush.msra.mxu0 0.0
        %767 = vmatpush.msra.mxu0 0.0
        %768 = vmatpush.msra.mxu0 0.0
        %769 = vmatpush.msra.mxu0 0.0
        %770 = vmatpush.msra.mxu0 0.0
        %771 = vmatpush.msra.mxu0 0.0
        %772 = vmatpush.msra.mxu0 0.0
        %773 = vmatpush.msra.mxu0 %v539
        %774 = vmatpush.msra.mxu0 %v507
        %775 = vmatpush.msra.mxu0 %v475
        %776 = vmatpush.msra.mxu0 %v443
        %777 = vmatmul.f32.gmra.mxu0 %v639
        %v778 = vpop.f32.mrf.mxu0
        %v779 = vadd.f32 %v579, %v778
        %780 = vdwg.mxu0
        %781 = vmatpush.msra.mxu0 0.0
        %782 = vmatpush.msra.mxu0 0.0
        %783 = vmatpush.msra.mxu0 0.0
        %784 = vmatpush.msra.mxu0 0.0
        %785 = vmatpush.msra.mxu0 0.0
        %786 = vmatpush.msra.mxu0 0.0
        %787 = vmatpush.msra.mxu0 0.0
        %788 = vmatpush.msra.mxu0 0.0
        %789 = vmatpush.msra.mxu0 0.0
        %790 = vmatpush.msra.mxu0 0.0
        %791 = vmatpush.msra.mxu0 0.0
        %792 = vmatpush.msra.mxu0 0.0
        %793 = vmatpush.msra.mxu0 %v540
        %794 = vmatpush.msra.mxu0 %v508
        %795 = vmatpush.msra.mxu0 %v476
        %796 = vmatpush.msra.mxu0 %v444
        %797 = vmatmul.f32.gmra.mxu0 %v639
        %v798 = vpop.f32.mrf.mxu0
        %v799 = vadd.f32 %v580, %v798
        %800 = vdwg.mxu0
        %801 = vmatpush.msra.mxu0 0.0
        %802 = vmatpush.msra.mxu0 0.0
        %803 = vmatpush.msra.mxu0 0.0
        %804 = vmatpush.msra.mxu0 0.0
        %805 = vmatpush.msra.mxu0 0.0
        %806 = vmatpush.msra.mxu0 0.0
        %807 = vmatpush.msra.mxu0 0.0
        %808 = vmatpush.msra.mxu0 0.0
        %809 = vmatpush.msra.mxu0 0.0
        %810 = vmatpush.msra.mxu0 0.0
        %811 = vmatpush.msra.mxu0 0.0
        %812 = vmatpush.msra.mxu0 0.0
        %813 = vmatpush.msra.mxu0 %v541
        %814 = vmatpush.msra.mxu0 %v509
        %815 = vmatpush.msra.mxu0 %v477
        %816 = vmatpush.msra.mxu0 %v445
        %817 = vmatmul.f32.gmra.mxu0 %v639
        %v818 = vpop.f32.mrf.mxu0
        %v819 = vadd.f32 %v581, %v818
        %820 = vdwg.mxu0
        %821 = vmatpush.msra.mxu0 0.0
        %822 = vmatpush.msra.mxu0 0.0
        %823 = vmatpush.msra.mxu0 0.0
        %824 = vmatpush.msra.mxu0 0.0
        %825 = vmatpush.msra.mxu0 0.0
        %826 = vmatpush.msra.mxu0 0.0
        %827 = vmatpush.msra.mxu0 0.0
        %828 = vmatpush.msra.mxu0 0.0
        %829 = vmatpush.msra.mxu0 0.0
        %830 = vmatpush.msra.mxu0 0.0
        %831 = vmatpush.msra.mxu0 0.0
        %832 = vmatpush.msra.mxu0 0.0
        %833 = vmatpush.msra.mxu0 %v542
        %834 = vmatpush.msra.mxu0 %v510
        %835 = vmatpush.msra.mxu0 %v478
        %836 = vmatpush.msra.mxu0 %v446
        %837 = vmatmul.f32.gmra.mxu0 %v639
        %v838 = vpop.f32.mrf.mxu0
        %v839 = vadd.f32 %v582, %v838
        %840 = vdwg.mxu0
        %841 = vmatpush.msra.mxu0 0.0
        %842 = vmatpush.msra.mxu0 0.0
        %843 = vmatpush.msra.mxu0 0.0
        %844 = vmatpush.msra.mxu0 0.0
        %845 = vmatpush.msra.mxu0 0.0
        %846 = vmatpush.msra.mxu0 0.0
        %847 = vmatpush.msra.mxu0 0.0
        %848 = vmatpush.msra.mxu0 0.0
        %849 = vmatpush.msra.mxu0 0.0
        %850 = vmatpush.msra.mxu0 0.0
        %851 = vmatpush.msra.mxu0 0.0
        %852 = vmatpush.msra.mxu0 0.0
        %853 = vmatpush.msra.mxu0 %v543
        %854 = vmatpush.msra.mxu0 %v511
        %855 = vmatpush.msra.mxu0 %v479
        %856 = vmatpush.msra.mxu0 %v447
        %857 = vmatmul.f32.gmra.mxu0 %v639
        %v858 = vpop.f32.mrf.mxu0
        %v859 = vadd.f32 %v583, %v858
        %860 = vdwg.mxu0
        %861 = vmatpush.msra.mxu0 0.0
        %862 = vmatpush.msra.mxu0 0.0
        %863 = vmatpush.msra.mxu0 0.0
        %864 = vmatpush.msra.mxu0 0.0
        %865 = vmatpush.msra.mxu0 0.0
        %866 = vmatpush.msra.mxu0 0.0
        %867 = vmatpush.msra.mxu0 0.0
        %868 = vmatpush.msra.mxu0 0.0
        %869 = vmatpush.msra.mxu0 0.0
        %870 = vmatpush.msra.mxu0 0.0
        %871 = vmatpush.msra.mxu0 0.0
        %872 = vmatpush.msra.mxu0 0.0
        %873 = vmatpush.msra.mxu0 %v544
        %874 = vmatpush.msra.mxu0 %v512
        %875 = vmatpush.msra.mxu0 %v480
        %876 = vmatpush.msra.mxu0 %v448
        %877 = vmatmul.f32.gmra.mxu0 %v639
        %v878 = vpop.f32.mrf.mxu0
        %v879 = vadd.f32 %v584, %v878
        %880 = vdwg.mxu0
        %881 = vmatpush.msra.mxu0 0.0
        %882 = vmatpush.msra.mxu0 0.0
        %883 = vmatpush.msra.mxu0 0.0
        %884 = vmatpush.msra.mxu0 0.0
        %885 = vmatpush.msra.mxu0 0.0
        %886 = vmatpush.msra.mxu0 0.0
        %887 = vmatpush.msra.mxu0 0.0
        %888 = vmatpush.msra.mxu0 0.0
        %889 = vmatpush.msra.mxu0 0.0
        %890 = vmatpush.msra.mxu0 0.0
        %891 = vmatpush.msra.mxu0 0.0
        %892 = vmatpush.msra.mxu0 0.0
        %893 = vmatpush.msra.mxu0 %v545
        %894 = vmatpush.msra.mxu0 %v513
        %895 = vmatpush.msra.mxu0 %v481
        %896 = vmatpush.msra.mxu0 %v449
        %897 = vmatmul.f32.gmra.mxu0 %v639
        %v898 = vpop.f32.mrf.mxu0
        %v899 = vadd.f32 %v585, %v898
        %900 = vdwg.mxu0
        %901 = vmatpush.msra.mxu0 0.0
        %902 = vmatpush.msra.mxu0 0.0
        %903 = vmatpush.msra.mxu0 0.0
        %904 = vmatpush.msra.mxu0 0.0
        %905 = vmatpush.msra.mxu0 0.0
        %906 = vmatpush.msra.mxu0 0.0
        %907 = vmatpush.msra.mxu0 0.0
        %908 = vmatpush.msra.mxu0 0.0
        %909 = vmatpush.msra.mxu0 0.0
        %910 = vmatpush.msra.mxu0 0.0
        %911 = vmatpush.msra.mxu0 0.0
        %912 = vmatpush.msra.mxu0 0.0
        %913 = vmatpush.msra.mxu0 %v546
        %914 = vmatpush.msra.mxu0 %v514
        %915 = vmatpush.msra.mxu0 %v482
        %916 = vmatpush.msra.mxu0 %v450
        %917 = vmatmul.f32.gmra.mxu0 %v639
        %v918 = vpop.f32.mrf.mxu0
        %v919 = vadd.f32 %v586, %v918
        %920 = vdwg.mxu0
        %921 = vmatpush.msra.mxu0 0.0
        %922 = vmatpush.msra.mxu0 0.0
        %923 = vmatpush.msra.mxu0 0.0
        %924 = vmatpush.msra.mxu0 0.0
        %925 = vmatpush.msra.mxu0 0.0
        %926 = vmatpush.msra.mxu0 0.0
        %927 = vmatpush.msra.mxu0 0.0
        %928 = vmatpush.msra.mxu0 0.0
        %929 = vmatpush.msra.mxu0 0.0
        %930 = vmatpush.msra.mxu0 0.0
        %931 = vmatpush.msra.mxu0 0.0
        %932 = vmatpush.msra.mxu0 0.0
        %933 = vmatpush.msra.mxu0 %v547
        %934 = vmatpush.msra.mxu0 %v515
        %935 = vmatpush.msra.mxu0 %v483
        %936 = vmatpush.msra.mxu0 %v451
        %937 = vmatmul.f32.gmra.mxu0 %v639
        %v938 = vpop.f32.mrf.mxu0
        %v939 = vadd.f32 %v587, %v938
        %940 = vdwg.mxu0
        %941 = vmatpush.msra.mxu0 0.0
        %942 = vmatpush.msra.mxu0 0.0
        %943 = vmatpush.msra.mxu0 0.0
        %944 = vmatpush.msra.mxu0 0.0
        %945 = vmatpush.msra.mxu0 0.0
        %946 = vmatpush.msra.mxu0 0.0
        %947 = vmatpush.msra.mxu0 0.0
        %948 = vmatpush.msra.mxu0 0.0
        %949 = vmatpush.msra.mxu0 0.0
        %950 = vmatpush.msra.mxu0 0.0
        %951 = vmatpush.msra.mxu0 0.0
        %952 = vmatpush.msra.mxu0 0.0
        %953 = vmatpush.msra.mxu0 %v548
        %954 = vmatpush.msra.mxu0 %v516
        %955 = vmatpush.msra.mxu0 %v484
        %956 = vmatpush.msra.mxu0 %v452
        %957 = vmatmul.f32.gmra.mxu0 %v639
        %v958 = vpop.f32.mrf.mxu0
        %v959 = vadd.f32 %v588, %v958
        %960 = vdwg.mxu0
        %961 = vmatpush.msra.mxu0 0.0
        %962 = vmatpush.msra.mxu0 0.0
        %963 = vmatpush.msra.mxu0 0.0
        %964 = vmatpush.msra.mxu0 0.0
        %965 = vmatpush.msra.mxu0 0.0
        %966 = vmatpush.msra.mxu0 0.0
        %967 = vmatpush.msra.mxu0 0.0
        %968 = vmatpush.msra.mxu0 0.0
        %969 = vmatpush.msra.mxu0 0.0
        %970 = vmatpush.msra.mxu0 0.0
        %971 = vmatpush.msra.mxu0 0.0
        %972 = vmatpush.msra.mxu0 0.0
        %973 = vmatpush.msra.mxu0 %v549
        %974 = vmatpush.msra.mxu0 %v517
        %975 = vmatpush.msra.mxu0 %v485
        %976 = vmatpush.msra.mxu0 %v453
        %977 = vmatmul.f32.gmra.mxu0 %v639
        %v978 = vpop.f32.mrf.mxu0
        %v979 = vadd.f32 %v589, %v978
        %980 = vdwg.mxu0
        %981 = vmatpush.msra.mxu0 0.0
        %982 = vmatpush.msra.mxu0 0.0
        %983 = vmatpush.msra.mxu0 0.0
        %984 = vmatpush.msra.mxu0 0.0
        %985 = vmatpush.msra.mxu0 0.0
        %986 = vmatpush.msra.mxu0 0.0
        %987 = vmatpush.msra.mxu0 0.0
        %988 = vmatpush.msra.mxu0 0.0
        %989 = vmatpush.msra.mxu0 0.0
        %990 = vmatpush.msra.mxu0 0.0
        %991 = vmatpush.msra.mxu0 0.0
        %992 = vmatpush.msra.mxu0 0.0
        %993 = vmatpush.msra.mxu0 %v550
        %994 = vmatpush.msra.mxu0 %v518
        %995 = vmatpush.msra.mxu0 %v486
        %996 = vmatpush.msra.mxu0 %v454
        %997 = vmatmul.f32.gmra.mxu0 %v639
        %v998 = vpop.f32.mrf.mxu0
        %v999 = vadd.f32 %v590, %v998
        %1000 = vdwg.mxu0
        %1001 = vmatpush.msra.mxu0 0.0
        %1002 = vmatpush.msra.mxu0 0.0
        %1003 = vmatpush.msra.mxu0 0.0
        %1004 = vmatpush.msra.mxu0 0.0
        %1005 = vmatpush.msra.mxu0 0.0
        %1006 = vmatpush.msra.mxu0 0.0
        %1007 = vmatpush.msra.mxu0 0.0
        %1008 = vmatpush.msra.mxu0 0.0
        %1009 = vmatpush.msra.mxu0 0.0
        %1010 = vmatpush.msra.mxu0 0.0
        %1011 = vmatpush.msra.mxu0 0.0
        %1012 = vmatpush.msra.mxu0 0.0
        %1013 = vmatpush.msra.mxu0 %v551
        %1014 = vmatpush.msra.mxu0 %v519
        %1015 = vmatpush.msra.mxu0 %v487
        %1016 = vmatpush.msra.mxu0 %v455
        %1017 = vmatmul.f32.gmra.mxu0 %v639
        %v1018 = vpop.f32.mrf.mxu0
        %v1019 = vadd.f32 %v591, %v1018
        %1020 = vdwg.mxu0
        %1021 = vmatpush.msra.mxu0 0.0
        %1022 = vmatpush.msra.mxu0 0.0
        %1023 = vmatpush.msra.mxu0 0.0
        %1024 = vmatpush.msra.mxu0 0.0
        %1025 = vmatpush.msra.mxu0 0.0
        %1026 = vmatpush.msra.mxu0 0.0
        %1027 = vmatpush.msra.mxu0 0.0
        %1028 = vmatpush.msra.mxu0 0.0
        %1029 = vmatpush.msra.mxu0 0.0
        %1030 = vmatpush.msra.mxu0 0.0
        %1031 = vmatpush.msra.mxu0 0.0
        %1032 = vmatpush.msra.mxu0 0.0
        %1033 = vmatpush.msra.mxu0 %v552
        %1034 = vmatpush.msra.mxu0 %v520
        %1035 = vmatpush.msra.mxu0 %v488
        %1036 = vmatpush.msra.mxu0 %v456
        %1037 = vmatmul.f32.gmra.mxu0 %v639
        %v1038 = vpop.f32.mrf.mxu0
        %v1039 = vadd.f32 %v592, %v1038
        %1040 = vdwg.mxu0
        %1041 = vmatpush.msra.mxu0 0.0
        %1042 = vmatpush.msra.mxu0 0.0
        %1043 = vmatpush.msra.mxu0 0.0
        %1044 = vmatpush.msra.mxu0 0.0
        %1045 = vmatpush.msra.mxu0 0.0
        %1046 = vmatpush.msra.mxu0 0.0
        %1047 = vmatpush.msra.mxu0 0.0
        %1048 = vmatpush.msra.mxu0 0.0
        %1049 = vmatpush.msra.mxu0 0.0
        %1050 = vmatpush.msra.mxu0 0.0
        %1051 = vmatpush.msra.mxu0 0.0
        %1052 = vmatpush.msra.mxu0 0.0
        %1053 = vmatpush.msra.mxu0 %v553
        %1054 = vmatpush.msra.mxu0 %v521
        %1055 = vmatpush.msra.mxu0 %v489
        %1056 = vmatpush.msra.mxu0 %v457
        %1057 = vmatmul.f32.gmra.mxu0 %v639
        %v1058 = vpop.f32.mrf.mxu0
        %v1059 = vadd.f32 %v593, %v1058
        %1060 = vdwg.mxu0
        %1061 = vmatpush.msra.mxu0 0.0
        %1062 = vmatpush.msra.mxu0 0.0
        %1063 = vmatpush.msra.mxu0 0.0
        %1064 = vmatpush.msra.mxu0 0.0
        %1065 = vmatpush.msra.mxu0 0.0
        %1066 = vmatpush.msra.mxu0 0.0
        %1067 = vmatpush.msra.mxu0 0.0
        %1068 = vmatpush.msra.mxu0 0.0
        %1069 = vmatpush.msra.mxu0 0.0
        %1070 = vmatpush.msra.mxu0 0.0
        %1071 = vmatpush.msra.mxu0 0.0
        %1072 = vmatpush.msra.mxu0 0.0
        %1073 = vmatpush.msra.mxu0 %v554
        %1074 = vmatpush.msra.mxu0 %v522
        %1075 = vmatpush.msra.mxu0 %v490
        %1076 = vmatpush.msra.mxu0 %v458
        %1077 = vmatmul.f32.gmra.mxu0 %v639
        %v1078 = vpop.f32.mrf.mxu0
        %v1079 = vadd.f32 %v594, %v1078
        %1080 = vdwg.mxu0
        %1081 = vmatpush.msra.mxu0 0.0
        %1082 = vmatpush.msra.mxu0 0.0
        %1083 = vmatpush.msra.mxu0 0.0
        %1084 = vmatpush.msra.mxu0 0.0
        %1085 = vmatpush.msra.mxu0 0.0
        %1086 = vmatpush.msra.mxu0 0.0
        %1087 = vmatpush.msra.mxu0 0.0
        %1088 = vmatpush.msra.mxu0 0.0
        %1089 = vmatpush.msra.mxu0 0.0
        %1090 = vmatpush.msra.mxu0 0.0
        %1091 = vmatpush.msra.mxu0 0.0
        %1092 = vmatpush.msra.mxu0 0.0
        %1093 = vmatpush.msra.mxu0 %v555
        %1094 = vmatpush.msra.mxu0 %v523
        %1095 = vmatpush.msra.mxu0 %v491
        %1096 = vmatpush.msra.mxu0 %v459
        %1097 = vmatmul.f32.gmra.mxu0 %v639
        %v1098 = vpop.f32.mrf.mxu0
        %v1099 = vadd.f32 %v595, %v1098
        %1100 = vdwg.mxu0
        %1101 = vmatpush.msra.mxu0 0.0
        %1102 = vmatpush.msra.mxu0 0.0
        %1103 = vmatpush.msra.mxu0 0.0
        %1104 = vmatpush.msra.mxu0 0.0
        %1105 = vmatpush.msra.mxu0 0.0
        %1106 = vmatpush.msra.mxu0 0.0
        %1107 = vmatpush.msra.mxu0 0.0
        %1108 = vmatpush.msra.mxu0 0.0
        %1109 = vmatpush.msra.mxu0 0.0
        %1110 = vmatpush.msra.mxu0 0.0
        %1111 = vmatpush.msra.mxu0 0.0
        %1112 = vmatpush.msra.mxu0 0.0
        %1113 = vmatpush.msra.mxu0 %v556
        %1114 = vmatpush.msra.mxu0 %v524
        %1115 = vmatpush.msra.mxu0 %v492
        %1116 = vmatpush.msra.mxu0 %v460
        %1117 = vmatmul.f32.gmra.mxu0 %v639
        %v1118 = vpop.f32.mrf.mxu0
        %v1119 = vadd.f32 %v596, %v1118
        %1120 = vdwg.mxu0
        %1121 = vmatpush.msra.mxu0 0.0
        %1122 = vmatpush.msra.mxu0 0.0
        %1123 = vmatpush.msra.mxu0 0.0
        %1124 = vmatpush.msra.mxu0 0.0
        %1125 = vmatpush.msra.mxu0 0.0
        %1126 = vmatpush.msra.mxu0 0.0
        %1127 = vmatpush.msra.mxu0 0.0
        %1128 = vmatpush.msra.mxu0 0.0
        %1129 = vmatpush.msra.mxu0 0.0
        %1130 = vmatpush.msra.mxu0 0.0
        %1131 = vmatpush.msra.mxu0 0.0
        %1132 = vmatpush.msra.mxu0 0.0
        %1133 = vmatpush.msra.mxu0 %v557
        %1134 = vmatpush.msra.mxu0 %v525
        %1135 = vmatpush.msra.mxu0 %v493
        %1136 = vmatpush.msra.mxu0 %v461
        %1137 = vmatmul.f32.gmra.mxu0 %v639
        %v1138 = vpop.f32.mrf.mxu0
        %v1139 = vadd.f32 %v597, %v1138
        %1140 = vdwg.mxu0
        %1141 = vmatpush.msra.mxu0 0.0
        %1142 = vmatpush.msra.mxu0 0.0
        %1143 = vmatpush.msra.mxu0 0.0
        %1144 = vmatpush.msra.mxu0 0.0
        %1145 = vmatpush.msra.mxu0 0.0
        %1146 = vmatpush.msra.mxu0 0.0
        %1147 = vmatpush.msra.mxu0 0.0
        %1148 = vmatpush.msra.mxu0 0.0
        %1149 = vmatpush.msra.mxu0 0.0
        %1150 = vmatpush.msra.mxu0 0.0
        %1151 = vmatpush.msra.mxu0 0.0
        %1152 = vmatpush.msra.mxu0 0.0
        %1153 = vmatpush.msra.mxu0 %v558
        %1154 = vmatpush.msra.mxu0 %v526
        %1155 = vmatpush.msra.mxu0 %v494
        %1156 = vmatpush.msra.mxu0 %v462
        %1157 = vmatmul.f32.gmra.mxu0 %v639
        %v1158 = vpop.f32.mrf.mxu0
        %v1159 = vadd.f32 %v598, %v1158
        %1160 = vdwg.mxu0
        %1161 = vmatpush.msra.mxu0 0.0
        %1162 = vmatpush.msra.mxu0 0.0
        %1163 = vmatpush.msra.mxu0 0.0
        %1164 = vmatpush.msra.mxu0 0.0
        %1165 = vmatpush.msra.mxu0 0.0
        %1166 = vmatpush.msra.mxu0 0.0
        %1167 = vmatpush.msra.mxu0 0.0
        %1168 = vmatpush.msra.mxu0 0.0
        %1169 = vmatpush.msra.mxu0 0.0
        %1170 = vmatpush.msra.mxu0 0.0
        %1171 = vmatpush.msra.mxu0 0.0
        %1172 = vmatpush.msra.mxu0 0.0
        %1173 = vmatpush.msra.mxu0 %v559
        %1174 = vmatpush.msra.mxu0 %v527
        %1175 = vmatpush.msra.mxu0 %v495
        %1176 = vmatpush.msra.mxu0 %v463
        %1177 = vmatmul.f32.gmra.mxu0 %v639
        %v1178 = vpop.f32.mrf.mxu0
        %v1179 = vadd.f32 %v599, %v1178
        %1180 = vdwg.mxu0
        %1181 = vmatpush.msra.mxu0 0.0
        %1182 = vmatpush.msra.mxu0 0.0
        %1183 = vmatpush.msra.mxu0 0.0
        %1184 = vmatpush.msra.mxu0 0.0
        %1185 = vmatpush.msra.mxu0 0.0
        %1186 = vmatpush.msra.mxu0 0.0
        %1187 = vmatpush.msra.mxu0 0.0
        %1188 = vmatpush.msra.mxu0 0.0
        %1189 = vmatpush.msra.mxu0 0.0
        %1190 = vmatpush.msra.mxu0 0.0
        %1191 = vmatpush.msra.mxu0 0.0
        %1192 = vmatpush.msra.mxu0 0.0
        %1193 = vmatpush.msra.mxu0 %v560
        %1194 = vmatpush.msra.mxu0 %v528
        %1195 = vmatpush.msra.mxu0 %v496
        %1196 = vmatpush.msra.mxu0 %v464
        %1197 = vmatmul.f32.gmra.mxu0 %v639
        %v1198 = vpop.f32.mrf.mxu0
        %v1199 = vadd.f32 %v600, %v1198
        %1200 = vdwg.mxu0
        %1201 = vmatpush.msra.mxu0 0.0
        %1202 = vmatpush.msra.mxu0 0.0
        %1203 = vmatpush.msra.mxu0 0.0
        %1204 = vmatpush.msra.mxu0 0.0
        %1205 = vmatpush.msra.mxu0 0.0
        %1206 = vmatpush.msra.mxu0 0.0
        %1207 = vmatpush.msra.mxu0 0.0
        %1208 = vmatpush.msra.mxu0 0.0
        %1209 = vmatpush.msra.mxu0 0.0
        %1210 = vmatpush.msra.mxu0 0.0
        %1211 = vmatpush.msra.mxu0 0.0
        %1212 = vmatpush.msra.mxu0 0.0
        %1213 = vmatpush.msra.mxu0 %v561
        %1214 = vmatpush.msra.mxu0 %v529
        %1215 = vmatpush.msra.mxu0 %v497
        %1216 = vmatpush.msra.mxu0 %v465
        %1217 = vmatmul.f32.gmra.mxu0 %v639
        %v1218 = vpop.f32.mrf.mxu0
        %v1219 = vadd.f32 %v601, %v1218
        %1220 = vdwg.mxu0
        %1221 = vmatpush.msra.mxu0 0.0
        %1222 = vmatpush.msra.mxu0 0.0
        %1223 = vmatpush.msra.mxu0 0.0
        %1224 = vmatpush.msra.mxu0 0.0
        %1225 = vmatpush.msra.mxu0 0.0
        %1226 = vmatpush.msra.mxu0 0.0
        %1227 = vmatpush.msra.mxu0 0.0
        %1228 = vmatpush.msra.mxu0 0.0
        %1229 = vmatpush.msra.mxu0 0.0
        %1230 = vmatpush.msra.mxu0 0.0
        %1231 = vmatpush.msra.mxu0 0.0
        %1232 = vmatpush.msra.mxu0 0.0
        %1233 = vmatpush.msra.mxu0 %v562
        %1234 = vmatpush.msra.mxu0 %v530
        %1235 = vmatpush.msra.mxu0 %v498
        %1236 = vmatpush.msra.mxu0 %v466
        %1237 = vmatmul.f32.gmra.mxu0 %v639
        %v1238 = vpop.f32.mrf.mxu0
        %v1239 = vadd.f32 %v602, %v1238
        %1240 = vdwg.mxu0
        %1241 = vmatpush.msra.mxu0 0.0
        %1242 = vmatpush.msra.mxu0 0.0
        %1243 = vmatpush.msra.mxu0 0.0
        %1244 = vmatpush.msra.mxu0 0.0
        %1245 = vmatpush.msra.mxu0 0.0
        %1246 = vmatpush.msra.mxu0 0.0
        %1247 = vmatpush.msra.mxu0 0.0
        %1248 = vmatpush.msra.mxu0 0.0
        %1249 = vmatpush.msra.mxu0 0.0
        %1250 = vmatpush.msra.mxu0 0.0
        %1251 = vmatpush.msra.mxu0 0.0
        %1252 = vmatpush.msra.mxu0 0.0
        %1253 = vmatpush.msra.mxu0 %v563
        %1254 = vmatpush.msra.mxu0 %v531
        %1255 = vmatpush.msra.mxu0 %v499
        %1256 = vmatpush.msra.mxu0 %v467
        %1257 = vmatmul.f32.gmra.mxu0 %v639
        %v1258 = vpop.f32.mrf.mxu0
        %v1259 = vadd.f32 %v603, %v1258
        %1260 = vdwg.mxu0
        %1261 = vmatpush.msra.mxu0 0.0
        %1262 = vmatpush.msra.mxu0 0.0
        %1263 = vmatpush.msra.mxu0 0.0
        %1264 = vmatpush.msra.mxu0 0.0
        %1265 = vmatpush.msra.mxu0 0.0
        %1266 = vmatpush.msra.mxu0 0.0
        %1267 = vmatpush.msra.mxu0 0.0
        %1268 = vmatpush.msra.mxu0 0.0
        %1269 = vmatpush.msra.mxu0 0.0
        %1270 = vmatpush.msra.mxu0 0.0
        %1271 = vmatpush.msra.mxu0 0.0
        %1272 = vmatpush.msra.mxu0 0.0
        %1273 = vmatpush.msra.mxu0 %v564
        %1274 = vmatpush.msra.mxu0 %v532
        %1275 = vmatpush.msra.mxu0 %v500
        %1276 = vmatpush.msra.mxu0 %v468
        %1277 = vmatmul.f32.gmra.mxu0 %v639
        %v1278 = vpop.f32.mrf.mxu0
        %v1279 = vadd.f32 %v604, %v1278
        %1280 = vdwg.mxu0
        %1281 = vst [vmem:[%s286] sm:$0xff] %v659
        %1282 = vst [vmem:[%s286 + $0x8] sm:$0xff] %v679
        %1283 = vst [vmem:[%s286 + $0x10] sm:$0xff] %v699
        %1284 = vst [vmem:[%s286 + $0x18] sm:$0xff] %v719
        %1285 = vst [vmem:[%s286 + $0x20] sm:$0xff] %v739
        %1286 = vst [vmem:[%s286 + $0x28] sm:$0xff] %v759
        %1287 = vst [vmem:[%s286 + $0x30] sm:$0xff] %v779
        %1288 = vst [vmem:[%s286 + $0x38] sm:$0xff] %v799
        %1289 = vst [vmem:[%s286 + $0x40] sm:$0xff] %v819
        %1290 = vst [vmem:[%s286 + $0x48] sm:$0xff] %v839
        %1291 = vst [vmem:[%s286 + $0x50] sm:$0xff] %v859
        %1292 = vst [vmem:[%s286 + $0x58] sm:$0xff] %v879
        %1293 = vst [vmem:[%s286 + $0x60] sm:$0xff] %v899
        %1294 = vst [vmem:[%s286 + $0x68] sm:$0xff] %v919
        %1295 = vst [vmem:[%s286 + $0x70] sm:$0xff] %v939
        %1296 = vst [vmem:[%s286 + $0x78] sm:$0xff] %v959
        %1297 = vst [vmem:[%s286 + $0x80] sm:$0xff] %v979
        %1298 = vst [vmem:[%s286 + $0x88] sm:$0xff] %v999
        %1299 = vst [vmem:[%s286 + $0x90] sm:$0xff] %v1019
        %1300 = vst [vmem:[%s286 + $0x98] sm:$0xff] %v1039
        %1301 = vst [vmem:[%s286 + $0xa0] sm:$0xff] %v1059
        %1302 = vst [vmem:[%s286 + $0xa8] sm:$0xff] %v1079
        %1303 = vst [vmem:[%s286 + $0xb0] sm:$0xff] %v1099
        %1304 = vst [vmem:[%s286 + $0xb8] sm:$0xff] %v1119
        %1305 = vst [vmem:[%s286 + $0xc0] sm:$0xff] %v1139
        %1306 = vst [vmem:[%s286 + $0xc8] sm:$0xff] %v1159
        %1307 = vst [vmem:[%s286 + $0xd0] sm:$0xff] %v1179
        %1308 = vst [vmem:[%s286 + $0xd8] sm:$0xff] %v1199
        %1309 = vst [vmem:[%s286 + $0xe0] sm:$0xff] %v1219
        %1310 = vst [vmem:[%s286 + $0xe8] sm:$0xff] %v1239
        %1311 = vst [vmem:[%s286 + $0xf0] sm:$0xff] %v1259
        %1312 = vst [vmem:[%s286 + $0xf8] sm:$0xff] %v1279
        %s1313 = sand.u32 %s182, 1
        %s1314 = scalar_lea.sflag [#allocation4], %s1313
        %s1315 = sand.u32 %s182, 1
        %s1316 = smul.addr %s1315, 256
        %s1317 = scalar_lea.vmem [#allocation5], %s1316
        // Predicated region
        $region53: #{tpu_custom_call.1} parent=47 // pred_check
          %p1318 = pneg %p192
        $region54: #{tpu_custom_call.1} parent=47 // pred_check_branch
          %1320 = sbr.rel (%p1318) target = $region56
        $region55: #{tpu_custom_call.1} parent=47 // pred_region
          %1322 = vsyncadd %s1314, 0
          %s1323 = smul.addr %s22, 32
          %s1324 = smul.addr %s1323, 8
          %s1325 = scalar_lea.hbm %s7, %s1324
          %s1327 = sshll.u32 %s1317, 4
          %s1328 = int_to_ptr.vmem [resolvable:$true] %s1327
          %s1329 = sshll.u32 %s1325, 4
          %s1330 = int_to_ptr.hbm [resolvable:$true] %s1329
          %1332 = dma.vmem_to_hbm [thread:$0]  %s1328, 4096, %s1330, %s1314
        $region56: #{tpu_custom_call.1} parent=47 // pred_fallthru
          _
      $region48: #{tpu_custom_call.1} parent=5 // pred_fallthru
        _
      %p1333 = scmp.le.s32.totalorder 2, %s17
      // Predicated region
      $region57: #{tpu_custom_call.1} parent=5 // pred_check
        %p1334 = pneg %p1333
      $region58: #{tpu_custom_call.1} parent=5 // pred_check_branch
        %1336 = sbr.rel (%p1334) target = $region60
      $region59: #{tpu_custom_call.1} parent=5 // pred_region
        %s1337 = ssub.s32 %s17, 2
        // Predicated region
        $region61: #{tpu_custom_call.1} parent=59 // pred_check
          %p1338 = pneg %p198
        $region62: #{tpu_custom_call.1} parent=59 // pred_check_branch
          %1340 = sbr.rel (%p1338) target = $region64
        $region63: #{tpu_custom_call.1} parent=59 // pred_region
          %s1341 = sand.u32 %s183, 1
          %s1342 = scalar_lea.sflag [#allocation4], %s1341
          %s1343 = sand.u32 %s183, 1
          %s1344 = smul.addr %s1343, 256
          %s1345 = scalar_lea.vmem [#allocation5], %s1344
          %1347 = dma.done %s1342, 4096
        $region64: #{tpu_custom_call.1} parent=59 // pred_fallthru
          _
      $region60: #{tpu_custom_call.1} parent=5 // pred_fallthru
        _
    $region6: #{tpu_custom_call.1} parent=1 // loop_footer
      %s21 = sadd.s32 1, %s17
    $region7: #{tpu_custom_call.1} parent=1 // loop_footer_branch
      %16 = sbr.rel target = $region3
    $region8: #{tpu_custom_call.1} parent=1 // loop_exit
      _
    %1348 = vsyncpa [#allocation3], 1
    %s1349 = scalar_lea.sflag [#allocation3], 1
    %1350 = vsyncpa %s1349, 1
    %1351 = vsyncpa [#allocation4], 1
    %s1352 = scalar_lea.sflag [#allocation4], 1
    %1353 = vsyncpa %s1352, 1

</llo_original>
